<compile_context>
chip_gen: v7x
topology: tpu7x:2x2x1
jax: 0.10.0
libtpu: 0.0.40
codegen_flags: <defaults>
</compile_context>

<pallas_src>
import functools
import math

import jax
import jax.numpy as jnp
from jax import lax
from jax.experimental import pallas as pl
from jax.experimental.pallas import tpu as pltpu


# --------------------------------- Kernel -------------------------------------
def mdn_kernel(x_ref, w_ref, b_ref, out_ref, *, num_gaussians, num_sigma):
    # x_ref: (TN, IN) bf16; w_ref: (IN, C) bf16; b_ref: (1, C) f32
    # out_ref: (TN, C) f32 with column layout [ logits | sigma | mu ].
    G = num_gaussians
    GO = num_sigma

    # Single MXU push for all three heads, f32 accumulation, f32 bias epilogue.
    y = (jnp.dot(x_ref[...], w_ref[...], preferred_element_type=jnp.float32)
         + b_ref[...])                                        # (TN, C) f32

    # Per-lane head masks (no narrow column slices, everything stays full-vreg).
    col = lax.broadcasted_iota(jnp.int32, y.shape, dimension=1)
    is_logit = col < G
    is_sigma = (col >= G) & (col < G + GO)

    # Numerically stable softmax over the logit columns only (masked reductions).
    neg_big = jnp.float32(-1e30)
    m = jnp.max(jnp.where(is_logit, y, neg_big), axis=-1, keepdims=True)
    z = y - jnp.where(is_logit, m, jnp.float32(0.0))
    e = jnp.exp(z)                     # logit cols: exp(l - m); sigma cols: exp(y)
    denom = jnp.sum(jnp.where(is_logit, e, jnp.float32(0.0)), axis=-1, keepdims=True)
    inv = pl.reciprocal(denom, approx=True)       # EUP slot, otherwise idle here

    # Fused epilogue: softmax weights | exp(sigma) | identity(mu).
    out = jnp.where(is_logit, e * inv, jnp.where(is_sigma, e, y))
    out_ref[...] = out.astype(out_ref.dtype)       # one lane-dense store per tile


# ------------------------------- Tiling helper ---------------------------------
def _pick_row_tile(n_rows):
    # Small inputs: one full-dim block (always legal, no (8,128) constraint issue).
    if n_rows < 256:
        return n_rows
    # Target ~512-row tiles but keep >= 2 grid steps so the "parallel" axis can
    # be sharded across both TensorCores on v7x.  Sublane-align to 8.
    n_tiles = max(2, -(-n_rows // 512))
    tn = -(-n_rows // n_tiles)
    return ((tn + 7) // 8) * 8


# -------------------------------- Wrapper --------------------------------------
def mdn_forward(x, params, num_gaussians, out_features, *, matmul_dtype=jnp.bfloat16):
    # x: [B, L, IN] float32
    B, L, IN = x.shape
    G, O = num_gaussians, out_features
    GO = G * O
    C = G + 2 * GO
    N = B * L

    # bf16 matmul inputs (halves input DMA bytes); bias + epilogue stay f32.
    x2 = x.reshape(N, IN).astype(matmul_dtype)
    w_all = params["w_all"].astype(matmul_dtype)
    b_all = params["b_all"].astype(jnp.float32)

    TN = _pick_row_tile(N)
    grid = (pl.cdiv(N, TN),)           # ragged last block handled by Pallas masking

    in_itm = jnp.dtype(matmul_dtype).itemsize
    cost = pl.CostEstimate(
        flops=2 * N * IN * C,
        transcendentals=N * C,
        bytes_accessed=(N * IN + IN * C) * in_itm + C * 4 + N * C * 4,
    )

    kern = functools.partial(mdn_kernel, num_gaussians=G, num_sigma=GO)

    fused = pl.pallas_call(
        kern,
        out_shape=jax.ShapeDtypeStruct((N, C), x.dtype),
        grid=grid,
        in_specs=[
            pl.BlockSpec((TN, IN), lambda i: (i, 0)),
            pl.BlockSpec((IN, C), lambda i: (0, 0)),    # grid-invariant weight
            pl.BlockSpec((1, C), lambda i: (0, 0)),     # grid-invariant bias
        ],
        out_specs=pl.BlockSpec((TN, C), lambda i: (i, 0)),
        compiler_params=pltpu.CompilerParams(
            dimension_semantics=("parallel",),
            vmem_limit_bytes=32 * 1024 * 1024,          # v5e default is only 16 MiB
        ),
        cost_estimate=cost,
    )(x2, w_all, b_all)

    # Wrapper-side splits/reshapes of the single lane-dense output slab.
    mixw = fused[:, :G].reshape(B, L, G)
    sigma = fused[:, G:G + GO].reshape(B, L, G, O)
    mu = fused[:, G + GO:].reshape(B, L, G, O)
    return mixw, sigma, mu


# ------------------------- Deterministic parameter init ------------------------
def init_params(key, in_features, out_features, num_gaussians):
    G, O = num_gaussians, out_features
    GO = G * O
    k1, k2, k3, k4, k5, k6 = jax.random.split(key, 6)
    s = 1.0 / math.sqrt(in_features)

    def uni(k, shape):
        return jax.random.uniform(k, shape, jnp.float32, minval=-s, maxval=s)

    ww, bw = uni(k1, (in_features, G)), uni(k2, (1, G))        # mixture-weight head
    ws, bs = uni(k3, (in_features, GO)), uni(k4, (1, GO))      # sigma head
    wm, bm = uni(k5, (in_features, GO)), uni(k6, (1, GO))      # mu head

    # Concatenate the three heads so the kernel does a single matmul.
    w_all = jnp.concatenate([ww, ws, wm], axis=1)              # (IN, G + 2*GO)
    b_all = jnp.concatenate([bw, bs, bm], axis=1)              # (1,  G + 2*GO)
    return {"w_all": w_all, "b_all": b_all}


# ------------------------------ Pure-JAX reference -----------------------------
def reference_forward(x, params, num_gaussians, out_features):
    hi = lax.Precision.HIGHEST
    B, L, _ = x.shape
    G, O = num_gaussians, out_features
    GO = G * O
    y = jnp.einsum("bld,de->ble", x, params["w_all"], precision=hi) + params["b_all"][None]
    w = jax.nn.softmax(y[..., :G], axis=-1)
    sigma = jnp.exp(y[..., G:G + GO]).reshape(B, L, G, O)
    mu = y[..., G + GO:].reshape(B, L, G, O)
    return w, sigma, mu


def _close(a, b, atol=1e-2, rtol=1e-2):
    return bool(jnp.all(jnp.abs(a - b) <= atol + rtol * jnp.abs(b)))


if __name__ == "__main__":
    # in_features=32, out_features=4, num_gaussians=8, B=2, src_len=8
    B, L, IN, O, G = 2, 8, 32, 4, 8
    key = jax.random.PRNGKey(0)
    k_in, k_p = jax.random.split(key)
    x = jax.random.normal(k_in, (B, L, IN), dtype=jnp.float32)
    params = init_params(k_p, IN, O, G)

    fwd = jax.jit(functools.partial(mdn_forward, num_gaussians=G, out_features=O))
    w_out, sigma_out, mu_out = fwd(x, params)
    (w_out, sigma_out, mu_out) = jax.block_until_ready((w_out, sigma_out, mu_out))

    assert w_out.shape == (B, L, G)
    assert sigma_out.shape == (B, L, G, O)
    assert mu_out.shape == (B, L, G, O)

    w_ref, sigma_ref, mu_ref = reference_forward(x, params, G, O)
    ok = (_close(w_out, w_ref) and _close(sigma_out, sigma_ref)
          and _close(mu_out, mu_ref))
    if ok:
        print("KERNEL_OK")
    else:
        err = max(
            float(jnp.max(jnp.abs(w_out - w_ref))),
            float(jnp.max(jnp.abs(sigma_out - sigma_ref))),
            float(jnp.max(jnp.abs(mu_out - mu_ref))),
        )
        print(f"MAX_ABS_ERR={err}")
</pallas_src>

<mosaic_0001>
module attributes {stable_mosaic.version = 11 : i64} {
  func.func @mdn_kernel(%arg0: i32, %arg1: memref<16x32xbf16, #tpu.memory_space<vmem>>, %arg2: memref<32x72xbf16, #tpu.memory_space<vmem>>, %arg3: memref<1x72xf32, #tpu.memory_space<vmem>>, %arg4: memref<16x72xf32, #tpu.memory_space<vmem>>) attributes {dimension_semantics = [#tpu.dimension_semantics<parallel>], iteration_bounds = array<i64: 1>, scalar_prefetch = 0 : i64, scratch_operands = 0 : i64, tpu.core_type = #tpu.core_type<tc>, window_params = [{transform_indices = @transform_0, window_bounds = array<i64: 16, 32>}, {pipeline_mode = #tpu.pipeline_mode<synchronous>, transform_indices = @transform_1, window_bounds = array<i64: 32, 72>}, {pipeline_mode = #tpu.pipeline_mode<synchronous>, transform_indices = @transform_2, window_bounds = array<i64: 1, 72>}, {transform_indices = @transform_3, window_bounds = array<i64: 16, 72>}]} {
    %c0 = arith.constant 0 : index
    %c0_0 = arith.constant 0 : index
    %0 = vector.load %arg1[%c0, %c0_0] : memref<16x32xbf16, #tpu.memory_space<vmem>>, vector<16x32xbf16>
    %c0_1 = arith.constant 0 : index
    %c0_2 = arith.constant 0 : index
    %1 = vector.load %arg2[%c0_1, %c0_2] : memref<32x72xbf16, #tpu.memory_space<vmem>>, vector<32x72xbf16>
    %cst = arith.constant dense<0.000000e+00> : vector<16x72xf32>
    %2 = tpu.matmul %0, %1, %cst {dimension_numbers = #tpu.dot_dimension_numbers<[1], [0], [0], [1], [0, 0, 1, 1], [], []>} : vector<16x32xbf16>, vector<32x72xbf16>, vector<16x72xf32> -> vector<16x72xf32>
    %c0_3 = arith.constant 0 : index
    %c0_4 = arith.constant 0 : index
    %3 = vector.load %arg3[%c0_3, %c0_4] : memref<1x72xf32, #tpu.memory_space<vmem>>, vector<1x72xf32>
    %4 = vector.broadcast %3 : vector<1x72xf32> to vector<16x72xf32>
    %5 = arith.addf %2, %4 : vector<16x72xf32>
    %6 = tpu.iota {dimensions = array<i32: 1>} : vector<16x72xi32>
    %c8_i32 = arith.constant 8 : i32
    %7 = vector.broadcast %c8_i32 : i32 to vector<16x72xi32>
    %8 = arith.cmpi slt, %6, %7 : vector<16x72xi32>
    %c8_i32_5 = arith.constant 8 : i32
    %9 = vector.broadcast %c8_i32_5 : i32 to vector<16x72xi32>
    %10 = arith.cmpi sge, %6, %9 : vector<16x72xi32>
    %c40_i32 = arith.constant 40 : i32
    %11 = vector.broadcast %c40_i32 : i32 to vector<16x72xi32>
    %12 = arith.cmpi slt, %6, %11 : vector<16x72xi32>
    %13 = arith.andi %10, %12 : vector<16x72xi1>
    %cst_6 = arith.constant -1.000000e+30 : f32
    %14 = vector.broadcast %cst_6 : f32 to vector<16x72xf32>
    %15 = arith.select %8, %5, %14 : vector<16x72xi1>, vector<16x72xf32>
    %cst_7 = arith.constant dense<0xFF800000> : vector<16xf32>
    %16 = vector.multi_reduction <maximumf>, %15, %cst_7 [1] : vector<16x72xf32> to vector<16xf32>
    %17 = vector.shape_cast %16 : vector<16xf32> to vector<16x1xf32>
    %cst_8 = arith.constant 0.000000e+00 : f32
    %18 = vector.shape_cast %17 : vector<16x1xf32> to vector<16x1xf32>
    %19 = vector.broadcast %18 : vector<16x1xf32> to vector<16x72xf32>
    %20 = vector.broadcast %cst_8 : f32 to vector<16x72xf32>
    %21 = arith.select %8, %19, %20 : vector<16x72xi1>, vector<16x72xf32>
    %22 = arith.subf %5, %21 : vector<16x72xf32>
    %23 = math.exp %22 : vector<16x72xf32>
    %cst_9 = arith.constant 0.000000e+00 : f32
    %24 = vector.broadcast %cst_9 : f32 to vector<16x72xf32>
    %25 = arith.select %8, %23, %24 : vector<16x72xi1>, vector<16x72xf32>
    %cst_10 = arith.constant dense<0.000000e+00> : vector<16xf32>
    %26 = vector.multi_reduction <add>, %25, %cst_10 [1] : vector<16x72xf32> to vector<16xf32>
    %27 = vector.shape_cast %26 : vector<16xf32> to vector<16x1xf32>
    %28 = tpu.reciprocal %27 {approx = true} : vector<16x1xf32> -> vector<16x1xf32>
    %29 = vector.broadcast %28 : vector<16x1xf32> to vector<16x72xf32>
    %30 = arith.mulf %23, %29 : vector<16x72xf32>
    %31 = arith.select %13, %23, %5 : vector<16x72xi1>, vector<16x72xf32>
    %32 = arith.select %8, %30, %31 : vector<16x72xi1>, vector<16x72xf32>
    %c0_11 = arith.constant 0 : index
    %c0_12 = arith.constant 0 : index
    %33 = vector.load %arg4[%c0_11, %c0_12] : memref<16x72xf32, #tpu.memory_space<vmem>>, vector<16x72xf32>
    tpu.vector_store %arg4[%c0_11, %c0_12], %32 {strides = array<i32>} : memref<16x72xf32, #tpu.memory_space<vmem>>, vector<16x72xf32>,
    return
  }
  func.func @transform_0(%arg0: i32) -> (i32, i32) {
    %c0_i32 = arith.constant 0 : i32
    %c0_i32_0 = arith.constant 0 : i32
    return %arg0, %c0_i32 : i32, i32
  }
  func.func @transform_1(%arg0: i32) -> (i32, i32) {
    %c0_i32 = arith.constant 0 : i32
    %c0_i32_0 = arith.constant 0 : i32
    %c0_i32_1 = arith.constant 0 : i32
    return %c0_i32, %c0_i32_0 : i32, i32
  }
  func.func @transform_2(%arg0: i32) -> (i32, i32) {
    %c0_i32 = arith.constant 0 : i32
    %c0_i32_0 = arith.constant 0 : i32
    %c0_i32_1 = arith.constant 0 : i32
    return %c0_i32, %c0_i32_0 : i32, i32
  }
  func.func @transform_3(%arg0: i32) -> (i32, i32) {
    %c0_i32 = arith.constant 0 : i32
    %c0_i32_0 = arith.constant 0 : i32
    return %arg0, %c0_i32 : i32, i32
  }
}

</mosaic_0001>

<llo_original>
// kernel: mdn_forward.1
$region0: #{mdn_forward.1}
  #allocation0 [shape = 'u32[]', space=smem, size = 0x4, offset = 0x4, fixed_abs, tag = 'smem constant byte address 0x4 - core index']
  #allocation1 [shape = 'u32[144,128]{1,0:T(1,128)}', space=vmem, size = 0x12000, scoped, tag = 'internal scratch']
  %s0 = inlined_call_operand.vmem [shape: bf16[16,32], index: 0, kind: input, shape index: {}]
  %s1 = inlined_call_operand.vmem [shape: bf16[32,72], index: 1, kind: input, shape index: {}]
  %s2 = inlined_call_operand.vmem [shape: f32[1,72], index: 2, kind: input, shape index: {}]
  %s3 = inlined_call_operand.vmem [shape: f32[16,72], index: 3, kind: output, shape index: {}]
  %s4 = sld [smem:[#allocation0]]
  $region22: #{mdn_forward.1} parent=0
    _
  %s6 = ssub.s32 1, %s4
  %s7 = scalar_select 0, %s6, %s4
  // Predicated region
  $region2: #{mdn_forward.1} parent=0 // pred_check
    _
  $region3: #{mdn_forward.1} parent=0 // pred_check_branch
    %9 = sbr.rel (0) target = $region5
  $region4: #{mdn_forward.1} parent=0 // pred_region
    _
  $region5: #{mdn_forward.1} parent=0 // pred_fallthru
    _
  // Predicated region
  $region6: #{mdn_forward.1} parent=0 // pred_check
    _
  $region7: #{mdn_forward.1} parent=0 // pred_check_branch
    %11 = sbr.rel (0) target = $region9
  $region8: #{mdn_forward.1} parent=0 // pred_region
    _
  $region9: #{mdn_forward.1} parent=0 // pred_fallthru
    _
  // Predicated region
  $region10: #{mdn_forward.1} parent=0 // pred_check
    _
  $region11: #{mdn_forward.1} parent=0 // pred_check_branch
    %13 = sbr.rel (0) target = $region13
  $region12: #{mdn_forward.1} parent=0 // pred_region
    _
  $region13: #{mdn_forward.1} parent=0 // pred_fallthru
    _
  %v15 = vld [vmem:[%s0] sm:$0xf]
  %v16 = vld [vmem:[%s0 + $0x4] sm:$0xf]
  %v17 = vld [vmem:[%s1] sm:$0xf]
  %v18 = vld [vmem:[%s1 + $0x4] sm:$0xf]
  %v19 = vld [vmem:[%s1 + $0x8] sm:$0xf]
  %v20 = vld [vmem:[%s1 + $0xc] sm:$0xf]
  %v21 = vld [vmem:[%s2] sm:$0x1]
  %v23 = vlaneseq
  %v24 = vshrl.u32 %v23, 7
  %v25 = vsub.s32 0, %v24
  %v26 = vrot.slane %v21, %v25
  %v30 = vunpack.c.l.b16 %v15
  %v31 = vunpack.c.l.b16 %v16
  %v32 = vpack.c.b16 %v31, %v30
  %v37 = vunpack.c.l.b16 %v17
  %v38 = vunpack.c.l.b16 %v18
  %v39 = vunpack.c.l.b16 %v19
  %v40 = vunpack.c.l.b16 %v20
  %v41 = vpack.c.b16 %v38, %v37
  %v42 = vpack.c.b16 %v40, %v39
  %vm45 = vcmask 261120
  %v47 = vsel %vm45, %v32, 0
  %49 = vmatprep.subr.bf16.mxu0 0
  %50 = vmatpush1.bf16.msra.mxu0 %v41
  %51 = vmatprep.subr.bf16.mxu0 0
  %52 = vmatpush1.bf16.msra.mxu0 %v42
  %53 = vmatprep.subr.bf16.mxu0 0
  %54 = vmatpush1.bf16.msra.mxu0 0
  %55 = vmatprep.subr.bf16.mxu0 0
  %56 = vmatpush1.bf16.msra.mxu0 0
  %57 = vmatprep.subr.bf16.mxu0 0
  %58 = vmatpush1.bf16.msra.mxu0 0
  %59 = vmatprep.subr.bf16.mxu0 0
  %60 = vmatpush1.bf16.msra.mxu0 0
  %61 = vmatprep.subr.bf16.mxu0 0
  %62 = vmatpush1.bf16.msra.mxu0 0
  %63 = vmatprep.subr.bf16.mxu0 0
  %64 = vmatpush1.bf16.msra.mxu0 0
  %65 = vmatprep.subr.bf16.mxu0 0
  %66 = vmatpush1.bf16.msra.mxu0 0
  %67 = vmatprep.subr.bf16.mxu0 0
  %68 = vmatpush1.bf16.msra.mxu0 0
  %69 = vmatprep.subr.bf16.mxu0 0
  %70 = vmatpush1.bf16.msra.mxu0 0
  %71 = vmatprep.subr.bf16.mxu0 0
  %72 = vmatpush1.bf16.msra.mxu0 0
  %73 = vmatprep.subr.bf16.mxu0 0
  %74 = vmatpush1.bf16.msra.mxu0 0
  %75 = vmatprep.subr.bf16.mxu0 0
  %76 = vmatpush1.bf16.msra.mxu0 0
  %77 = vmatprep.subr.bf16.mxu0 0
  %78 = vmatpush1.bf16.msra.mxu0 0
  %79 = vmatprep.subr.bf16.mxu0 0
  %80 = vmatpush1.bf16.msra.mxu0 0
  %81 = vmatprep.mubr.bf16.mxu0 0
  %82 = vmatmul.mubr.bf16.gmra.mrb[0].mxu0 %v47
  %v83 = vpop.f32.mrb[0].mxu0
  %v84 = vadd.f32 %v26, %v83
  %v85 = vpop.f32.mrb[0].mxu0
  %v86 = vpop.f32.mrb[0].mxu0
  %v87 = vadd.f32 %v26, %v86
  %v88 = vpop.f32.mrb[0].mxu0
  %89 = vdwg.mxu0
  %v90 = vlaneseq
  %v91 = vand.u32 %v90, 127
  %vm92 = vcmp.lt.s32.totalorder %v91, 8
  %vm93 = vcmp.ge.s32.totalorder %v91, 8
  %vm94 = vcmp.lt.s32.totalorder %v91, 40
  %vm95 = vmand %vm93, %vm94
  %v96 = vsel %vm92, %v84, -1e+30
  %v97 = vsel %vm92, %v87, -1e+30
  %vm98 = vcmask 588800
  %v99 = vsel %vm98, %v96, -inf
  %100 = vmax.xlane.f32.xlu0 %v99
  %v101 = vpop.xlane.xlu0 %100
  %v102 = vsel %vm98, %v97, -inf
  %103 = vmax.xlane.f32.xlu0 %v102
  %v104 = vpop.xlane.xlu0 %103
  %v105 = vsel %vm92, %v101, 0.0
  %v106 = vsel %vm92, %v104, 0.0
  %v107 = vsub.f32 %v84, %v105
  %v108 = vsub.f32 %v87, %v106
  %v109 = vmul.f32 %v107, 1.442695
  %v110 = vpow.pop %v109
  %v111 = vmul.f32 %v108, 1.442695
  %v112 = vpow.pop %v111
  %v113 = vsel %vm92, %v110, 0.0
  %v114 = vsel %vm92, %v112, 0.0
  %v115 = vsel %vm98, %v113, 0.0
  %116 = vadd.xlane.f32.xlu0 %v115
  %v117 = vpop.xlane.xlu0 %116
  %v118 = vsel %vm98, %v114, 0.0
  %119 = vadd.xlane.f32.xlu0 %v118
  %v120 = vpop.xlane.xlu0 %119
  %v121 = vrcp.pop %v117
  %v122 = vrcp.pop %v120
  %v123 = vmul.f32 %v110, %v121
  %v124 = vmul.f32 %v112, %v122
  %v125 = vsel %vm95, %v110, %v84
  %v126 = vsel %vm95, %v112, %v87
  %v127 = vsel %vm92, %v123, %v125
  %v128 = vsel %vm92, %v124, %v126
  %129 = vst.msk [vmem:[%s3] sm:$0xff] %vm98, %v127
  %130 = vst.msk [vmem:[%s3 + $0x8] sm:$0xff] %vm98, %v128
  // Predicated region
  $region14: #{mdn_forward.1} parent=0 // pred_check
    _
  $region15: #{mdn_forward.1} parent=0 // pred_check_branch
    %132 = sbr.rel (0) target = $region17
  $region16: #{mdn_forward.1} parent=0 // pred_region
    _
  $region17: #{mdn_forward.1} parent=0 // pred_fallthru
    _
  // Predicated region
  $region18: #{mdn_forward.1} parent=0 // pred_check
    _
  $region19: #{mdn_forward.1} parent=0 // pred_check_branch
    %134 = sbr.rel (0) target = $region21
  $region20: #{mdn_forward.1} parent=0 // pred_region
    _
  $region21: #{mdn_forward.1} parent=0 // pred_fallthru
    _

</llo_original>
